<compile_context>
chip_gen: v5e
topology: v5e:2x2
jax: 0.10.0
libtpu: 0.0.40
codegen_flags: <defaults>
</compile_context>

<pallas_src>
import math
import jax
import jax.numpy as jnp
from jax.experimental import pallas as pl
from jax.experimental.pallas import tpu as pltpu


def _round_up(x, m):
    return (x + m - 1) // m * m


def _pick_tile(dim, align, cap):
    """Tile size: multiple of `align`, <= cap.

    If the (aligned) dim fits under the cap -> one block, no extra padding.
    Otherwise pick the tile that minimizes (#blocks, padding, -tile): fewest
    blocks first (fewest weight/x re-streams), then least padding waste.
    """
    dim_al = _round_up(max(dim, align), align)
    if dim_al <= cap:
        return dim_al
    best_key, best_t = None, align
    t = align
    while t <= cap:
        n_blocks = -(-dim_al // t)
        waste = n_blocks * t - dim_al
        key = (n_blocks, waste, -t)
        if best_key is None or key < best_key:
            best_key, best_t = key, t
        t += align
    return best_t


# ----------------------------------------------------------------------------
# Kernels
# ----------------------------------------------------------------------------
def _linear_kernel_inplace(x_ref, wt_ref, b_ref, o_ref):
    # f32 output: accumulate directly into the K-resident output tile.
    k = pl.program_id(2)

    @pl.when(k == 0)
    def _init():
        o_ref[...] = jnp.broadcast_to(b_ref[...].astype(o_ref.dtype), o_ref.shape)

    o_ref[...] += jnp.dot(
        x_ref[...], wt_ref[...], preferred_element_type=jnp.float32
    )


def _linear_kernel_scratch(x_ref, wt_ref, b_ref, o_ref, acc_ref):
    # Sub-f32 output: f32 scratch accumulation + final downcast.
    k = pl.program_id(2)

    @pl.when(k == 0)
    def _init():
        acc_ref[...] = jnp.broadcast_to(
            b_ref[...].astype(jnp.float32), acc_ref.shape
        )

    acc_ref[...] += jnp.dot(
        x_ref[...], wt_ref[...], preferred_element_type=jnp.float32
    )

    @pl.when(k == pl.num_programs(2) - 1)
    def _finalize():
        o_ref[...] = acc_ref[...].astype(o_ref.dtype)


# ----------------------------------------------------------------------------
# Wrapper
# ----------------------------------------------------------------------------
def classify_forward(x, weight_t, bias):
    """y = x @ weight_t + bias, applied over the last axis of x.

    x:        [..., in_features]
    weight_t: [in_features, out_features]  (PRE-transposed nn.Linear weight;
              store it this way once -- see init_classify_params -- so no
              per-call HBM transpose happens. For a torch-layout weight use
              classify_forward(x, weight.T, bias).)
    bias:     [out_features]
    """
    *lead, k = x.shape
    k_w, n = weight_t.shape
    assert k_w == k, "weight_t must be [in_features, out_features]"
    m = 1
    for d in lead:
        m *= int(d)
    m = max(m, 1)

    out_dtype = x.dtype
    use_scratch = out_dtype != jnp.float32

    # ---- regime-aware, lane-dense tile selection ----------------------------
    tm = _pick_tile(m, 8, 512)      # small M -> single block, weight read once
    tn = _pick_tile(n, 128, 1024)   # long contiguous DMA rows on the weight
    tk = _pick_tile(k, 128, 1024)

    m_p = _round_up(max(m, tm), tm)
    n_p = _round_up(max(n, tn), tn)
    k_p = _round_up(max(k, tk), tk)

    # v7x has 2 TensorCores: make sure the parallel (M, N) grid has >= 2 blocks
    # when it can be split without breaking (8, 128) alignment.
    if (m_p // tm) * (n_p // tn) == 1:
        if tn >= 256 and (tn // 2) % 128 == 0:
            tn //= 2
        elif tm >= 16 and (tm // 2) % 8 == 0:
            tm //= 2
        m_p = _round_up(max(m, tm), tm)
        n_p = _round_up(max(n, tn), tn)

    # ---- VMEM budget (double buffers included) + explicit limit -------------
    x_item = jnp.dtype(x.dtype).itemsize
    w_item = jnp.dtype(weight_t.dtype).itemsize
    b_item = jnp.dtype(bias.dtype).itemsize
    o_item = jnp.dtype(out_dtype).itemsize

    def _footprint(tm_, tn_, tk_, k_p_):
        nbuf_w_ = 3 if (k_p_ // tk_) >= 3 else 2
        fp_ = (
            2 * tm_ * tk_ * x_item        # x double buffer
            + nbuf_w_ * tk_ * tn_ * w_item  # weight stream (deeper buffering)
            + 2 * tm_ * tn_ * o_item      # output double buffer
            + 2 * tn_ * b_item            # bias
        )
        if use_scratch:
            fp_ += tm_ * tn_ * 4          # f32 accumulator
        return fp_, nbuf_w_

    VMEM_BUDGET = 44 << 20  # headroom under v7x's 64 MiB physical VMEM
    fp, nbuf_w = _footprint(tm, tn, tk, k_p)
    while fp > VMEM_BUDGET and (tk > 128 or tn > 128 or tm > 8):
        if tk >= tn and tk > 128:
            tk = max(128, (tk // 2 // 128) * 128)
        elif tn > 128:
            tn = max(128, (tn // 2 // 128) * 128)
        else:
            tm = max(8, (tm // 2 // 8) * 8)
        m_p = _round_up(max(m, tm), tm)
        n_p = _round_up(max(n, tn), tn)
        k_p = _round_up(max(k, tk), tk)
        fp, nbuf_w = _footprint(tm, tn, tk, k_p)

    vmem_limit = int(min(max(fp + (8 << 20), 32 << 20), 56 << 20))

    # ---- prepare operands: flatten + zero-pad (no-op when already aligned) --
    x2d = x.reshape(m, k)
    wt = weight_t
    b2d = bias.reshape(1, n)
    if (m_p, k_p) != (m, k):
        x2d = jnp.pad(x2d, ((0, m_p - m), (0, k_p - k)))
    if (k_p, n_p) != (k, n):
        wt = jnp.pad(wt, ((0, k_p - k), (0, n_p - n)))
    if n_p != n:
        b2d = jnp.pad(b2d, ((0, 0), (0, n_p - n)))
    # Zero padding is exact: padded K contributes 0; padded M/N sliced off.

    grid = (m_p // tm, n_p // tn, k_p // tk)
    grid_m, grid_n, grid_k = grid

    cost = pl.CostEstimate(
        flops=2 * m * n * k,
        transcendentals=0,
        bytes_accessed=int(
            x2d.size * x_item * grid_n       # x re-streamed per N tile
            + wt.size * w_item * grid_m      # weight re-streamed per M tile
            + b2d.size * b_item * grid_m
            + m_p * n_p * o_item             # output written once
        ),
    )

    w_index = lambda i, j, kk: (kk, j)
    if grid_k >= 3 and nbuf_w > 2:
        try:
            w_spec = pl.BlockSpec(
                (tk, tn), w_index, pipeline_mode=pl.Buffered(nbuf_w)
            )
        except TypeError:  # older jax without pipeline_mode kwarg
            w_spec = pl.BlockSpec((tk, tn), w_index)
    else:
        w_spec = pl.BlockSpec((tk, tn), w_index)

    in_specs = [
        pl.BlockSpec((tm, tk), lambda i, j, kk: (i, kk)),  # x tile
        w_spec,                                            # W^T tile
        pl.BlockSpec((1, tn), lambda i, j, kk: (0, j)),    # bias tile
    ]
    out_spec = pl.BlockSpec((tm, tn), lambda i, j, kk: (i, j))

    if use_scratch:
        kernel = _linear_kernel_scratch
        scratch = [pltpu.VMEM((tm, tn), jnp.float32)]
    else:
        kernel = _linear_kernel_inplace
        scratch = []

    out2d = pl.pallas_call(
        kernel,
        out_shape=jax.ShapeDtypeStruct((m_p, n_p), out_dtype),
        grid_spec=pltpu.PrefetchScalarGridSpec(
            num_scalar_prefetch=0,
            grid=grid,
            in_specs=in_specs,
            out_specs=out_spec,
            scratch_shapes=scratch,
        ),
        compiler_params=pltpu.CompilerParams(
            dimension_semantics=("parallel", "parallel", "arbitrary"),
            vmem_limit_bytes=vmem_limit,
        ),
        cost_estimate=cost,
    )(x2d, wt, b2d)

    if (m_p, n_p) != (m, n):
        out2d = out2d[:m, :n]
    return out2d.reshape(*lead, n)


def init_classify_params(key, input_features, output_features, dtype=jnp.float32):
    """Mirror PyTorch nn.Linear default init U(-1/sqrt(in), 1/sqrt(in)).

    Returns the weight already in [in_features, out_features] (i.e. W.T)
    layout so classify_forward never pays a per-call HBM transpose.
    """
    kw, kb = jax.random.split(key)
    bound = 1.0 / math.sqrt(input_features)
    weight_t = jax.random.uniform(
        kw, (input_features, output_features), dtype=dtype,
        minval=-bound, maxval=bound,
    )
    bias = jax.random.uniform(
        kb, (output_features,), dtype=dtype, minval=-bound, maxval=bound
    )
    return weight_t, bias


if __name__ == "__main__":
    key = jax.random.PRNGKey(0)
    k_x, k_p, k_x2, k_p2 = jax.random.split(key, 4)

    # ---- small f32 check (accumulate-directly-into-output path) -------------
    batch, seq = 2, 8
    in_f, out_f = 32, 16
    x = jax.random.normal(k_x, (batch, seq, in_f), dtype=jnp.float32)
    weight_t, bias = init_classify_params(k_p, in_f, out_f, dtype=jnp.float32)

    y = jax.block_until_ready(classify_forward(x, weight_t, bias))
    y_ref = jnp.einsum("bsk,kn->bsn", x, weight_t) + bias
    assert y.shape == (batch, seq, out_f)
    assert jnp.allclose(y, y_ref, atol=1e-5, rtol=1e-5)

    # ---- bf16 check (f32 scratch accumulator + downcast path) ---------------
    batch2, seq2 = 4, 16
    in_f2, out_f2 = 256, 384
    x2 = jax.random.normal(k_x2, (batch2, seq2, in_f2), dtype=jnp.bfloat16)
    w2_t, b2 = init_classify_params(k_p2, in_f2, out_f2, dtype=jnp.bfloat16)

    y2 = jax.block_until_ready(classify_forward(x2, w2_t, b2))
    y2_ref = (
        jnp.einsum(
            "bsk,kn->bsn",
            x2.astype(jnp.float32),
            w2_t.astype(jnp.float32),
        )
        + b2.astype(jnp.float32)
    )
    assert y2.shape == (batch2, seq2, out_f2)
    assert jnp.allclose(y2.astype(jnp.float32), y2_ref, atol=2e-2, rtol=2e-2)

    print("KERNEL_OK")
</pallas_src>

<mosaic_0001>
module attributes {stable_mosaic.version = 11 : i64} {
  func.func @_linear_kernel_inplace(%arg0: i32, %arg1: i32, %arg2: i32, %arg3: memref<8x128xf32, #tpu.memory_space<vmem>>, %arg4: memref<128x128xf32, #tpu.memory_space<vmem>>, %arg5: memref<1x128xf32, #tpu.memory_space<vmem>>, %arg6: memref<8x128xf32, #tpu.memory_space<vmem>>) attributes {dimension_semantics = [#tpu.dimension_semantics<parallel>, #tpu.dimension_semantics<parallel>, #tpu.dimension_semantics<arbitrary>], iteration_bounds = array<i64: 2, 1, 1>, scalar_prefetch = 0 : i64, scratch_operands = 0 : i64, tpu.core_type = #tpu.core_type<tc>, window_params = [{transform_indices = @transform_0, window_bounds = array<i64: 8, 128>}, {transform_indices = @transform_1, window_bounds = array<i64: 128, 128>}, {transform_indices = @transform_2, window_bounds = array<i64: 1, 128>}, {transform_indices = @transform_3, window_bounds = array<i64: 8, 128>}]} {
    %c0_i32 = arith.constant 0 : i32
    %0 = arith.cmpi eq, %arg2, %c0_i32 : i32
    %1 = arith.extui %0 : i1 to i32
    %c0_i32_0 = arith.constant 0 : i32
    %2 = arith.cmpi ne, %1, %c0_i32_0 : i32
    scf.if %2 {
      %c0_8 = arith.constant 0 : index
      %c0_9 = arith.constant 0 : index
      %9 = vector.load %arg5[%c0_8, %c0_9] : memref<1x128xf32, #tpu.memory_space<vmem>>, vector<1x128xf32>
      %10 = vector.shape_cast %9 : vector<1x128xf32> to vector<1x128xf32>
      %11 = vector.broadcast %10 : vector<1x128xf32> to vector<8x128xf32>
      %c0_10 = arith.constant 0 : index
      %c0_11 = arith.constant 0 : index
      %12 = vector.load %arg6[%c0_10, %c0_11] : memref<8x128xf32, #tpu.memory_space<vmem>>, vector<8x128xf32>
      tpu.vector_store %arg6[%c0_10, %c0_11], %11 {strides = array<i32>} : memref<8x128xf32, #tpu.memory_space<vmem>>, vector<8x128xf32>,
    } else {
    }
    %c0 = arith.constant 0 : index
    %c0_1 = arith.constant 0 : index
    %3 = vector.load %arg6[%c0, %c0_1] : memref<8x128xf32, #tpu.memory_space<vmem>>, vector<8x128xf32>
    %c0_2 = arith.constant 0 : index
    %c0_3 = arith.constant 0 : index
    %4 = vector.load %arg3[%c0_2, %c0_3] : memref<8x128xf32, #tpu.memory_space<vmem>>, vector<8x128xf32>
    %c0_4 = arith.constant 0 : index
    %c0_5 = arith.constant 0 : index
    %5 = vector.load %arg4[%c0_4, %c0_5] : memref<128x128xf32, #tpu.memory_space<vmem>>, vector<128x128xf32>
    %cst = arith.constant dense<0.000000e+00> : vector<8x128xf32>
    %6 = tpu.matmul %4, %5, %cst {dimension_numbers = #tpu.dot_dimension_numbers<[1], [0], [0], [1], [0, 0, 1, 1], [], []>} : vector<8x128xf32>, vector<128x128xf32>, vector<8x128xf32> -> vector<8x128xf32>
    %7 = arith.addf %3, %6 : vector<8x128xf32>
    %c0_6 = arith.constant 0 : index
    %c0_7 = arith.constant 0 : index
    %8 = vector.load %arg6[%c0_6, %c0_7] : memref<8x128xf32, #tpu.memory_space<vmem>>, vector<8x128xf32>
    tpu.vector_store %arg6[%c0_6, %c0_7], %7 {strides = array<i32>} : memref<8x128xf32, #tpu.memory_space<vmem>>, vector<8x128xf32>,
    return
  }
  func.func @transform_0(%arg0: i32, %arg1: i32, %arg2: i32) -> (i32, i32) {
    %c0_i32 = arith.constant 0 : i32
    return %arg0, %arg2 : i32, i32
  }
  func.func @transform_1(%arg0: i32, %arg1: i32, %arg2: i32) -> (i32, i32) {
    %c0_i32 = arith.constant 0 : i32
    return %arg2, %arg1 : i32, i32
  }
  func.func @transform_2(%arg0: i32, %arg1: i32, %arg2: i32) -> (i32, i32) {
    %c0_i32 = arith.constant 0 : i32
    %c0_i32_0 = arith.constant 0 : i32
    return %c0_i32, %arg1 : i32, i32
  }
  func.func @transform_3(%arg0: i32, %arg1: i32, %arg2: i32) -> (i32, i32) {
    %c0_i32 = arith.constant 0 : i32
    return %arg0, %arg1 : i32, i32
  }
}

</mosaic_0001>

<llo_original>
// kernel: tpu_custom_call.1
$region0: #{tpu_custom_call.1}
  #allocation0 [shape = 'u32[]', space=smem, size = 0x4, offset = 0x4, fixed_abs, tag = 'smem constant byte address 0x4 - core index']
  #allocation1 [shape = 'u32[72,128]{1,0:T(1,128)}', space=vmem, size = 0x9000, scoped, tag = 'internal scratch']
  %s0 = inlined_call_operand.hbm [shape: f32[16,128], index: 0, kind: input, shape index: {}]
  %s1 = inlined_call_operand.hbm [shape: f32[128,128], index: 1, kind: input, shape index: {}]
  %s2 = inlined_call_operand.vmem [shape: f32[1,128], index: 2, kind: input, shape index: {}]
  %s3 = inlined_call_operand.hbm [shape: f32[16,128], index: 3, kind: output, shape index: {}]
  %s4 = sld [smem:[#allocation0]]
  $region57: #{tpu_custom_call.1} parent=0
    _
  %s6 = ssub.s32 1, %s4
  %s7 = scalar_select 0, %s6, %s4
  $region1: #{tpu_custom_call.1} parent=0
    #allocation2 [shape = 'u8[8192]{0}', space=vmem, size = 0x2000, scoped, tag = 'input window, operand 0']
    #allocation3 [shape = 's32[2]{0}', space=sflag, size = 0x8, scoped, tag = 'scoped memory for tpu_custom_call.1']
    #allocation4 [shape = 's32[2]{0}', space=sflag, size = 0x8, scoped, tag = 'scoped memory for tpu_custom_call.1']
    #allocation5 [shape = 'u8[65536]{0}', space=vmem, size = 0x10000, scoped, tag = 'input window, operand 1, single buffered']
    #allocation6 [shape = 's32[1]{0}', space=sflag, size = 0x4, scoped, tag = 'scoped memory for tpu_custom_call.1']
    #allocation7 [shape = 'u8[8192]{0}', space=vmem, size = 0x2000, scoped, tag = 'output window, operand 0']
    %8 = vsyncpa [#allocation3], 0
    %s9 = scalar_lea.sflag [#allocation3], 1
    %10 = vsyncpa %s9, 0
    %11 = vsyncpa [#allocation6], 0
    %12 = vsyncpa [#allocation4], 0
    %s13 = scalar_lea.sflag [#allocation4], 1
    %14 = vsyncpa %s13, 0
    loop: start=0, step=1, limit=4
    $region2: #{tpu_custom_call.1} parent=1 // loop_pre_header
      _
    $region3: #{tpu_custom_call.1} parent=1 // loop_header
      %s16 = sphi 0, %s20
      %p17 = scmp.ge.s32.totalorder %s16, 4
      %s23 = sphi 0, %s42
      %s24 = sphi 0, %s38
      %s25 = sphi 0, %s34
      %s26 = sphi 0, %s23
      %s27 = sphi 0, %s24
      %s28 = sphi 0, %s25
      %s29 = sphi 0, %s26
      %s30 = sphi 0, %s27
      %s31 = sphi 0, %s28
      %s47 = sphi 0, %s49
      %s50 = sphi 0, %s47
      %s51 = sphi 0, %s50
      %s67 = sphi 0, %s51
      %s75 = sphi 0, %s77
      %s78 = sphi 0, %s75
      %s79 = sphi 0, %s78
      %s95 = sphi 0, %s79
      %s101 = sphi 0, %s103
      %s104 = sphi 0, %s101
      %s105 = sphi 0, %s104
      %s121 = sphi 0, %s105
      %s129 = sphi 0, %s131
      %s132 = sphi 0, %s129
      %s133 = sphi 0, %s132
      %s149 = sphi 0, %s133
    $region4: #{tpu_custom_call.1} parent=1 // loop_header_branch
      %19 = sbr.rel (%p17) target = $region8
    $region5: #{tpu_custom_call.1} parent=1 // loop_body
      %s21 = ssub.s32 %s16, 1
      %s22 = ssub.s32 %s16, 2
      %s32 = sadd.s32 1, %s25
      %p33 = scmp.ge.s32.totalorder %s32, 1
      %s34 = scalar_select %p33, 0, %s32
      %s35 = sadd.s32 1, %s24
      %s36 = scalar_select %p33, %s35, %s24
      %p37 = scmp.ge.s32.totalorder %s36, 1
      %s38 = scalar_select %p37, 0, %s36
      %s39 = sadd.s32 1, %s23
      %s40 = scalar_select %p37, %s39, %s23
      %p41 = scmp.ge.s32.totalorder %s40, 2
      %s42 = scalar_select %p41, 0, %s40
      %s43 = ssub.s32 %s23, %s42
      %s44 = ssub.s32 %s25, %s34
      %s45 = sor.u32 %s43, %s44
      %p46 = scmp.eq.s32.totalorder %s45, 0
      %s48 = sadd.s32 %s47, 1
      %s49 = scalar_select %p46, %s47, %s48
      %p52 = pneg %p46
      %p53 = scmp.eq.s32.totalorder %s16, 1
      %p54 = por %p52, %p53
      %p55 = scmp.ne.s32.totalorder %s47, %s50
      %p56 = scmp.eq.s32.totalorder %s16, 0
      %p57 = por %p55, %p56
      %p58 = scmp.ne.s32.totalorder %s47, %s50
      %p59 = scmp.eq.s32.totalorder %s21, 1
      %p60 = por %p58, %p59
      %p61 = scmp.ne.s32.totalorder %s50, %s51
      %p62 = scmp.eq.s32.totalorder %s21, 0
      %p63 = por %p61, %p62
      %p64 = scmp.ne.s32.totalorder %s50, %s51
      %p65 = scmp.eq.s32.totalorder %s22, 1
      %p66 = por %p64, %p65
      %p68 = scmp.ne.s32.totalorder %s51, %s67
      %p69 = scmp.eq.s32.totalorder %s22, 0
      %p70 = por %p68, %p69
      %s71 = ssub.s32 %s25, %s34
      %s72 = ssub.s32 %s24, %s38
      %s73 = sor.u32 %s71, %s72
      %p74 = scmp.eq.s32.totalorder %s73, 0
      %s76 = sadd.s32 %s75, 1
      %s77 = scalar_select %p74, %s75, %s76
      %p80 = pneg %p74
      %p81 = scmp.eq.s32.totalorder %s16, 1
      %p82 = por %p80, %p81
      %p83 = scmp.ne.s32.totalorder %s75, %s78
      %p84 = scmp.eq.s32.totalorder %s16, 0
      %p85 = por %p83, %p84
      %p86 = scmp.ne.s32.totalorder %s75, %s78
      %p87 = scmp.eq.s32.totalorder %s21, 1
      %p88 = por %p86, %p87
      %p89 = scmp.ne.s32.totalorder %s78, %s79
      %p90 = scmp.eq.s32.totalorder %s21, 0
      %p91 = por %p89, %p90
      %p92 = scmp.ne.s32.totalorder %s78, %s79
      %p93 = scmp.eq.s32.totalorder %s22, 1
      %p94 = por %p92, %p93
      %p96 = scmp.ne.s32.totalorder %s79, %s95
      %p97 = scmp.eq.s32.totalorder %s22, 0
      %p98 = por %p96, %p97
      %s99 = ssub.s32 %s24, %s38
      %p100 = scmp.eq.s32.totalorder %s99, 0
      %s102 = sadd.s32 %s101, 1
      %s103 = scalar_select %p100, %s101, %s102
      %p106 = pneg %p100
      %p107 = scmp.eq.s32.totalorder %s16, 1
      %p108 = por %p106, %p107
      %p109 = scmp.ne.s32.totalorder %s101, %s104
      %p110 = scmp.eq.s32.totalorder %s16, 0
      %p111 = por %p109, %p110
      %p112 = scmp.ne.s32.totalorder %s101, %s104
      %p113 = scmp.eq.s32.totalorder %s21, 1
      %p114 = por %p112, %p113
      %p115 = scmp.ne.s32.totalorder %s104, %s105
      %p116 = scmp.eq.s32.totalorder %s21, 0
      %p117 = por %p115, %p116
      %p118 = scmp.ne.s32.totalorder %s104, %s105
      %p119 = scmp.eq.s32.totalorder %s22, 1
      %p120 = por %p118, %p119
      %p122 = scmp.ne.s32.totalorder %s105, %s121
      %p123 = scmp.eq.s32.totalorder %s22, 0
      %p124 = por %p122, %p123
      %s125 = ssub.s32 %s23, %s42
      %s126 = ssub.s32 %s24, %s38
      %s127 = sor.u32 %s125, %s126
      %p128 = scmp.eq.s32.totalorder %s127, 0
      %s130 = sadd.s32 %s129, 1
      %s131 = scalar_select %p128, %s129, %s130
      %p134 = pneg %p128
      %p135 = scmp.eq.s32.totalorder %s16, 1
      %p136 = por %p134, %p135
      %p137 = scmp.ne.s32.totalorder %s129, %s132
      %p138 = scmp.eq.s32.totalorder %s16, 0
      %p139 = por %p137, %p138
      %p140 = scmp.ne.s32.totalorder %s129, %s132
      %p141 = scmp.eq.s32.totalorder %s21, 1
      %p142 = por %p140, %p141
      %p143 = scmp.ne.s32.totalorder %s132, %s133
      %p144 = scmp.eq.s32.totalorder %s21, 0
      %p145 = por %p143, %p144
      %p146 = scmp.ne.s32.totalorder %s132, %s133
      %p147 = scmp.eq.s32.totalorder %s22, 1
      %p148 = por %p146, %p147
      %p150 = scmp.ne.s32.totalorder %s133, %s149
      %p151 = scmp.eq.s32.totalorder %s22, 0
      %p152 = por %p150, %p151
      %p153 = scmp.le.s32.totalorder 1, %s16
      %p154 = scmp.lt.s32.totalorder %s16, 3
      %p155 = pnand %p153, %p154
      %p156 = pneg %p155
      // Predicated region
      $region9: #{tpu_custom_call.1} parent=5 // pred_check
        _
      $region10: #{tpu_custom_call.1} parent=5 // pred_check_branch
        %158 = sbr.rel (%p155) target = $region12
      $region11: #{tpu_custom_call.1} parent=5 // pred_region
        %s159 = ssub.s32 %s16, 1
        // Predicated region
        $region13: #{tpu_custom_call.1} parent=11 // pred_check
          %p160 = pneg %p91
        $region14: #{tpu_custom_call.1} parent=11 // pred_check_branch
          %162 = sbr.rel (%p160) target = $region16
        $region15: #{tpu_custom_call.1} parent=11 // pred_region
          %s163 = smul.u32 16, %s28
          %165 = vsyncadd [#allocation6], 0
          %s166 = sadd.s32 %s27, %s163
          %s167 = smul.addr %s166, 8
          %s168 = scalar_lea.hbm %s1, %s167
          %s169 = sshll.u32 %s168, 4
          %s170 = int_to_ptr.hbm [resolvable:$true] %s169
          %s171 = sshll.u32 [#allocation5], 4
          %s172 = int_to_ptr.vmem [resolvable:$true] %s171
          %177 = dma.hbm_to_vmem [thread:$0]  %s170, 2048, %s172, [#allocation6], 128, 128, 8
        $region16: #{tpu_custom_call.1} parent=11 // pred_fallthru
          _
        // Predicated region
        $region17: #{tpu_custom_call.1} parent=11 // pred_check
          %p178 = pneg %p117
        $region18: #{tpu_custom_call.1} parent=11 // pred_check_branch
          %180 = sbr.rel (%p178) target = $region20
        $region19: #{tpu_custom_call.1} parent=11 // pred_region
          %p181 = scmp.lt.s32.totalorder %s27, 0
          %s182 = scalar_select %p181, %s27, 0
          %s183 = scalar_lea.vmem %s2, %s182
        $region20: #{tpu_custom_call.1} parent=11 // pred_fallthru
          _
      $region12: #{tpu_custom_call.1} parent=5 // pred_fallthru
        _
      %p184 = scmp.lt.s32.totalorder %s16, 2
      // Predicated region
      $region21: #{tpu_custom_call.1} parent=5 // pred_check
        %p185 = pneg %p184
      $region22: #{tpu_custom_call.1} parent=5 // pred_check_branch
        %187 = sbr.rel (%p185) target = $region24
      $region23: #{tpu_custom_call.1} parent=5 // pred_region
        // Predicated region
        $region25: #{tpu_custom_call.1} parent=23 // pred_check
          %p188 = pneg %p57
        $region26: #{tpu_custom_call.1} parent=23 // pred_check_branch
          %190 = sbr.rel (%p188) target = $region28
        $region27: #{tpu_custom_call.1} parent=23 // pred_region
          %s191 = sand.u32 %s47, 1
          %s192 = scalar_lea.sflag [#allocation3], %s191
          %s193 = sand.u32 %s47, 1
          %s194 = smul.addr %s193, 8
          %s195 = scalar_lea.vmem [#allocation2], %s194
          %197 = vsyncadd %s192, 0
          %s198 = sadd.s32 %s25, %s23
          %s199 = smul.addr %s198, 8
          %s200 = scalar_lea.hbm %s0, %s199
          %s202 = sshll.u32 %s200, 4
          %s203 = int_to_ptr.hbm [resolvable:$true] %s202
          %s204 = sshll.u32 %s195, 4
          %s205 = int_to_ptr.vmem [resolvable:$true] %s204
          %207 = dma.hbm_to_vmem [thread:$0]  %s203, 128, %s205, %s192
        $region28: #{tpu_custom_call.1} parent=23 // pred_fallthru
          _
      $region24: #{tpu_custom_call.1} parent=5 // pred_fallthru
        _
      %p208 = scmp.le.s32.totalorder 1, %s16
      %p209 = scmp.lt.s32.totalorder %s16, 3
      %p210 = pnand %p208, %p209
      %p211 = pneg %p210
      // Predicated region
      $region29: #{tpu_custom_call.1} parent=5 // pred_check
        _
      $region30: #{tpu_custom_call.1} parent=5 // pred_check_branch
        %213 = sbr.rel (%p210) target = $region32
      $region31: #{tpu_custom_call.1} parent=5 // pred_region
        %s214 = ssub.s32 %s16, 1
        %s215 = sand.u32 %s50, 1
        %s216 = scalar_lea.sflag [#allocation3], %s215
        %s217 = sand.u32 %s50, 1
        %s218 = smul.addr %s217, 8
        %s219 = scalar_lea.vmem [#allocation2], %s218
        // Predicated region
        $region33: #{tpu_custom_call.1} parent=31 // pred_check
          %p220 = pneg %p63
        $region34: #{tpu_custom_call.1} parent=31 // pred_check_branch
          %222 = sbr.rel (%p220) target = $region36
        $region35: #{tpu_custom_call.1} parent=31 // pred_region
          %224 = dma.done %s216, 128
        $region36: #{tpu_custom_call.1} parent=31 // pred_fallthru
          _
        // Predicated region
        $region37: #{tpu_custom_call.1} parent=31 // pred_check
          %p225 = pneg %p91
        $region38: #{tpu_custom_call.1} parent=31 // pred_check_branch
          %227 = sbr.rel (%p225) target = $region40
        $region39: #{tpu_custom_call.1} parent=31 // pred_region
          %229 = dma.done [#allocation6], 2048
        $region40: #{tpu_custom_call.1} parent=31 // pred_fallthru
          _
        %s230 = sand.u32 %s50, 1
        %s231 = scalar_lea.sflag [#allocation3], %s230
        %s232 = sand.u32 %s50, 1
        %s233 = smul.addr %s232, 8
        %s234 = scalar_lea.vmem [#allocation2], %s233
        %p235 = pneg %p63
        %p236 = pneg %p60
        %p237 = pneg %p91
        %p238 = pneg %p88
        %p239 = scmp.lt.s32.totalorder %s27, 0
        %s240 = scalar_select %p239, %s27, 0
        %s241 = scalar_lea.vmem %s2, %s240
        %p242 = pneg %p117
        %p243 = pneg %p114
        %p244 = pneg %p145
        %p245 = pneg %p142
        %s246 = sand.u32 %s132, 1
        %s247 = scalar_lea.sflag [#allocation4], %s246
        %s248 = sand.u32 %s132, 1
        %s249 = smul.addr %s248, 8
        %s250 = scalar_lea.vmem [#allocation7], %s249
        %s251 = smul.u32 16, %s28
        %p252 = scmp.lt.s32.totalorder %s27, 0
        %s253 = scalar_select %p252, %s27, 0
        %s254 = scalar_lea.vmem %s2, %s253
        %p255 = scmp.eq.s32.totalorder %s28, 0
        // Predicated region
        $region41: #{tpu_custom_call.1} parent=31 // pred_check
          %p256 = pneg %p255
        $region42: #{tpu_custom_call.1} parent=31 // pred_check_branch
          %258 = sbr.rel (%p256) target = $region44
        $region43: #{tpu_custom_call.1} parent=31 // pred_region
          %v259 = vld [vmem:[%s254] sm:$0x1]
          %v261 = vperm.slane %v259, 0
          %263 = vst [vmem:[%s250] sm:$0xff] %v261
        $region44: #{tpu_custom_call.1} parent=31 // pred_fallthru
          _
        %v264 = vld [vmem:[%s250] sm:$0xff]
        %v265 = vld [vmem:[%s219] sm:$0xff]
        %v266 = vld [vmem:[#allocation5] sm:$0xff]
        %v267 = vld [vmem:[#allocation5 + $0x8] sm:$0xff]
        %v268 = vld [vmem:[#allocation5 + $0x10] sm:$0xff]
        %v269 = vld [vmem:[#allocation5 + $0x18] sm:$0xff]
        %v270 = vld [vmem:[#allocation5 + $0x20] sm:$0xff]
        %v271 = vld [vmem:[#allocation5 + $0x28] sm:$0xff]
        %v272 = vld [vmem:[#allocation5 + $0x30] sm:$0xff]
        %v273 = vld [vmem:[#allocation5 + $0x38] sm:$0xff]
        %v274 = vld [vmem:[#allocation5 + $0x40] sm:$0xff]
        %v275 = vld [vmem:[#allocation5 + $0x48] sm:$0xff]
        %v276 = vld [vmem:[#allocation5 + $0x50] sm:$0xff]
        %v277 = vld [vmem:[#allocation5 + $0x58] sm:$0xff]
        %v278 = vld [vmem:[#allocation5 + $0x60] sm:$0xff]
        %v279 = vld [vmem:[#allocation5 + $0x68] sm:$0xff]
        %v280 = vld [vmem:[#allocation5 + $0x70] sm:$0xff]
        %v281 = vld [vmem:[#allocation5 + $0x78] sm:$0xff]
        %282 = vmatpush.msra.mxu0 %v281
        %283 = vmatpush.msra.mxu0 %v280
        %284 = vmatpush.msra.mxu0 %v279
        %285 = vmatpush.msra.mxu0 %v278
        %286 = vmatpush.msra.mxu0 %v277
        %287 = vmatpush.msra.mxu0 %v276
        %288 = vmatpush.msra.mxu0 %v275
        %289 = vmatpush.msra.mxu0 %v274
        %290 = vmatpush.msra.mxu0 %v273
        %291 = vmatpush.msra.mxu0 %v272
        %292 = vmatpush.msra.mxu0 %v271
        %293 = vmatpush.msra.mxu0 %v270
        %294 = vmatpush.msra.mxu0 %v269
        %295 = vmatpush.msra.mxu0 %v268
        %296 = vmatpush.msra.mxu0 %v267
        %297 = vmatpush.msra.mxu0 %v266
        %298 = vmatmul.f32.gmra.mxu0 %v265
        %v299 = vpop.f32.mrf.mxu0
        %v300 = vadd.f32 0.0, %v299
        %301 = vdwg.mxu0
        %v302 = vadd.f32 %v264, %v300
        %303 = vst [vmem:[%s250] sm:$0xff] %v302
        %s304 = sand.u32 %s132, 1
        %s305 = scalar_lea.sflag [#allocation4], %s304
        %s306 = sand.u32 %s132, 1
        %s307 = smul.addr %s306, 8
        %s308 = scalar_lea.vmem [#allocation7], %s307
        // Predicated region
        $region45: #{tpu_custom_call.1} parent=31 // pred_check
          %p309 = pneg %p142
        $region46: #{tpu_custom_call.1} parent=31 // pred_check_branch
          %311 = sbr.rel (%p309) target = $region48
        $region47: #{tpu_custom_call.1} parent=31 // pred_region
          %313 = vsyncadd %s305, 0
          %s314 = sadd.s32 %s27, %s26
          %s315 = smul.addr %s314, 8
          %s316 = scalar_lea.hbm %s3, %s315
          %s318 = sshll.u32 %s308, 4
          %s319 = int_to_ptr.vmem [resolvable:$true] %s318
          %s320 = sshll.u32 %s316, 4
          %s321 = int_to_ptr.hbm [resolvable:$true] %s320
          %323 = dma.vmem_to_hbm [thread:$0]  %s319, 128, %s321, %s305
        $region48: #{tpu_custom_call.1} parent=31 // pred_fallthru
          _
      $region32: #{tpu_custom_call.1} parent=5 // pred_fallthru
        _
      %p324 = scmp.le.s32.totalorder 2, %s16
      // Predicated region
      $region49: #{tpu_custom_call.1} parent=5 // pred_check
        %p325 = pneg %p324
      $region50: #{tpu_custom_call.1} parent=5 // pred_check_branch
        %327 = sbr.rel (%p325) target = $region52
      $region51: #{tpu_custom_call.1} parent=5 // pred_region
        %s328 = ssub.s32 %s16, 2
        // Predicated region
        $region53: #{tpu_custom_call.1} parent=51 // pred_check
          %p329 = pneg %p148
        $region54: #{tpu_custom_call.1} parent=51 // pred_check_branch
          %331 = sbr.rel (%p329) target = $region56
        $region55: #{tpu_custom_call.1} parent=51 // pred_region
          %s332 = sand.u32 %s133, 1
          %s333 = scalar_lea.sflag [#allocation4], %s332
          %s334 = sand.u32 %s133, 1
          %s335 = smul.addr %s334, 8
          %s336 = scalar_lea.vmem [#allocation7], %s335
          %338 = dma.done %s333, 128
        $region56: #{tpu_custom_call.1} parent=51 // pred_fallthru
          _
      $region52: #{tpu_custom_call.1} parent=5 // pred_fallthru
        _
    $region6: #{tpu_custom_call.1} parent=1 // loop_footer
      %s20 = sadd.s32 1, %s16
    $region7: #{tpu_custom_call.1} parent=1 // loop_footer_branch
      %15 = sbr.rel target = $region3
    $region8: #{tpu_custom_call.1} parent=1 // loop_exit
      _
    %339 = vsyncpa [#allocation3], 1
    %s340 = scalar_lea.sflag [#allocation3], 1
    %341 = vsyncpa %s340, 1
    %342 = vsyncpa [#allocation6], 1
    %343 = vsyncpa [#allocation4], 1
    %s344 = scalar_lea.sflag [#allocation4], 1
    %345 = vsyncpa %s344, 1

</llo_original>
